<compile_context>
chip_gen: v7x
topology: tpu7x:2x2x1
jax: 0.10.0
libtpu: 0.0.40
codegen_flags: <defaults>
</compile_context>

<pallas_src>
import functools

import jax
import jax.numpy as jnp
import numpy as np
from jax.experimental import pallas as pl
from jax.experimental.pallas import tpu as pltpu

EPS = 1e-5
_VMEM_LIMIT = 48 * 1024 * 1024   # fits v5e/v6e (128 MiB) and v7x (64 MiB) comfortably
_ROW_CAP = 512                   # row-tile size for matmul / elementwise kernels


def _round_up(x, m):
    return (x + m - 1) // m * m


def _row_tiles(M, cap=_ROW_CAP):
    """Pick (padded_rows, row_tile) so the tile divides the (padded) row count."""
    if M <= cap:
        return M, M
    for t in (cap, 256, 128, 64, 32, 16, 8):
        if M % t == 0:
            return M, t
    Mp = _round_up(M, cap)
    return Mp, cap


# ---------------------------------------------------------------------------
# Pallas kernels
# ---------------------------------------------------------------------------
def _conv3x3_kernel(*refs, H, W, relu, has_res):
    """Direct 3x3x3 conv over one (n, d) output plane.

    Inputs (flat-padded planes, (H+2)*(W+2) rows each):
      x0,x1,x2 : planes d, d+1, d+2 of the padded input   (1,1,P2,Cin) bf16
      w        : (27, Cin, Cout) bf16 tap weights (resident)
      s, t     : (1, Cout) f32 folded BN scale / shift
      [xr, wr, br] : optional fused residual 1x1 conv (input plane, weight, bias)
    Output o : (1, 1, La, Cout) with La = H*(W+2)-2 (width-padded rows, stripped outside).
    """
    if has_res:
        x0, x1, x2, w_ref, s_ref, t_ref, xr, wr_ref, br_ref, o_ref, acc_ref = refs
    else:
        x0, x1, x2, w_ref, s_ref, t_ref, o_ref, acc_ref = refs

    Wp = W + 2
    La = H * Wp - 2
    acc_ref[...] = jnp.zeros_like(acc_ref)
    planes = (x0, x1, x2)
    for kd in range(3):
        xk = planes[kd]
        for kh in range(3):
            for kw in range(3):
                tap = (kd * 3 + kh) * 3 + kw
                off = kh * Wp + kw
                slab = xk[0, 0, pl.ds(off, La), :]          # (La, Cin) bf16
                acc_ref[...] += jnp.dot(slab, w_ref[tap],
                                        preferred_element_type=jnp.float32)

    y = acc_ref[...] * s_ref[...] + t_ref[...]
    if relu:
        y = jnp.maximum(y, 0.0)
    if has_res:
        rs = xr[0, 0, pl.ds(Wp + 1, La), :]                 # residual input slab
        res = jnp.dot(rs, wr_ref[...],
                      preferred_element_type=jnp.float32) + br_ref[...]
        y = jnp.maximum(y + res, 0.0)                       # relu(out + residual)
    o_ref[0, 0] = y.astype(o_ref.dtype)


def _matmul_kernel(x_ref, w_ref, s_ref, t_ref, o_ref, *, relu):
    """o = act((x @ w) * s + t); weight / scale / shift are grid-resident."""
    y = jnp.dot(x_ref[...], w_ref[...], preferred_element_type=jnp.float32)
    y = y * s_ref[...] + t_ref[...]
    if relu:
        y = jnp.maximum(y, 0.0)
    o_ref[...] = y.astype(o_ref.dtype)


def _attention_kernel(g_ref, x_ref, wg_ref, wx_ref, b_ref, wp_ref, tp_ref, o_ref):
    """Fused attention gate: relu(BN(Wg g)+BN(Wx x)) -> psi conv+BN -> sigmoid -> x*psi."""
    a = (jnp.dot(g_ref[...], wg_ref[...], preferred_element_type=jnp.float32)
         + jnp.dot(x_ref[...], wx_ref[...], preferred_element_type=jnp.float32)
         + b_ref[...])
    a = jnp.maximum(a, 0.0)
    lin = jnp.sum(a * wp_ref[...], axis=-1, keepdims=True) + tp_ref[...]
    psi = jax.nn.sigmoid(lin)
    o_ref[...] = (x_ref[...].astype(jnp.float32) * psi).astype(o_ref.dtype)


def _maxpool_kernel(x_ref, o_ref):
    # x_ref block: (tm, 8, C) -> max over the 2x2x2 window axis.
    o_ref[...] = jnp.max(x_ref[...].astype(jnp.float32), axis=1).astype(o_ref.dtype)


# ---------------------------------------------------------------------------
# Layout helpers (thin plain-JAX glue)
# ---------------------------------------------------------------------------
def _pad_flatten(x):
    """(N,D,H,W,C) -> zero-padded, per-plane-flattened (N, D+2, (H+2)*(W+2), C) bf16."""
    N, D, H, W, C = x.shape
    xb = x.astype(jnp.bfloat16)
    xp = jnp.pad(xb, ((0, 0), (1, 1), (1, 1), (1, 1), (0, 0)))
    return xp.reshape(N, D + 2, (H + 2) * (W + 2), C)


def _unflatten(y_flat, H, W):
    """(N, D, H*(W+2)-2, C) flat-padded conv output -> clean (N,D,H,W,C)."""
    N, D, La, C = y_flat.shape
    Wp = W + 2
    y = jnp.pad(y_flat, ((0, 0), (0, 0), (0, H * Wp - La), (0, 0)))
    return y.reshape(N, D, H, Wp, C)[:, :, :, :W, :]


def _fold_bn(bias, bn):
    """Fold conv bias + eval-mode BatchNorm into per-channel scale / shift."""
    if bn is None:
        return jnp.ones_like(bias), bias
    gamma, beta, mean, var = bn
    s = gamma / jnp.sqrt(var + EPS)
    t = (bias - mean) * s + beta
    return s, t


# ---------------------------------------------------------------------------
# Pallas wrappers
# ---------------------------------------------------------------------------
def conv3x3_flat(xp_flat, w27, scale, shift, *, H, W, relu, res=None,
                 out_dtype=jnp.bfloat16):
    """3x3x3 conv (padding=1) over a flat-padded activation; returns flat-padded output."""
    N, Dp2, P2, Cin = xp_flat.shape
    D = Dp2 - 2
    Cout = w27.shape[-1]
    Wp = W + 2
    La = H * Wp - 2
    assert P2 == (H + 2) * Wp

    def plane_spec(kd, ch):
        return pl.BlockSpec((1, 1, P2, ch), lambda n, d, _kd=kd: (n, d + _kd, 0, 0))

    in_specs = [plane_spec(kd, Cin) for kd in range(3)]
    in_specs += [
        pl.BlockSpec((27, Cin, Cout), lambda n, d: (0, 0, 0)),
        pl.BlockSpec((1, Cout), lambda n, d: (0, 0)),
        pl.BlockSpec((1, Cout), lambda n, d: (0, 0)),
    ]
    inputs = [xp_flat, xp_flat, xp_flat,
              w27.astype(jnp.bfloat16),
              scale.reshape(1, Cout).astype(jnp.float32),
              shift.reshape(1, Cout).astype(jnp.float32)]
    if res is not None:
        xr_flat, rw, rb = res
        Cr = xr_flat.shape[-1]
        assert xr_flat.shape[2] == P2
        in_specs += [
            pl.BlockSpec((1, 1, P2, Cr), lambda n, d: (n, d + 1, 0, 0)),
            pl.BlockSpec((Cr, Cout), lambda n, d: (0, 0)),
            pl.BlockSpec((1, Cout), lambda n, d: (0, 0)),
        ]
        inputs += [xr_flat.astype(jnp.bfloat16),
                   rw.astype(jnp.bfloat16),
                   rb.reshape(1, Cout).astype(jnp.float32)]

    kern = functools.partial(_conv3x3_kernel, H=H, W=W, relu=relu,
                             has_res=res is not None)
    return pl.pallas_call(
        kern,
        out_shape=jax.ShapeDtypeStruct((N, D, La, Cout), out_dtype),
        grid=(N, D),
        in_specs=in_specs,
        out_specs=pl.BlockSpec((1, 1, La, Cout), lambda n, d: (n, d, 0, 0)),
        scratch_shapes=[pltpu.VMEM((La, Cout), jnp.float32)],
        compiler_params=pltpu.CompilerParams(
            dimension_semantics=("parallel", "parallel"),
            vmem_limit_bytes=_VMEM_LIMIT),
    )(*inputs)


def matmul_1x1(x, w, scale, shift, *, relu=False, out_dtype=jnp.bfloat16):
    """x: (M, K), w: (K, Cout); o = act((x@w)*scale + shift). Weight is VMEM-resident."""
    M, K = x.shape
    Cout = w.shape[1]
    Mp, tm = _row_tiles(M)
    xb = x.astype(jnp.bfloat16)
    if Mp != M:
        xb = jnp.pad(xb, ((0, Mp - M), (0, 0)))
    out = pl.pallas_call(
        functools.partial(_matmul_kernel, relu=relu),
        out_shape=jax.ShapeDtypeStruct((Mp, Cout), out_dtype),
        grid=(Mp // tm,),
        in_specs=[
            pl.BlockSpec((tm, K), lambda i: (i, 0)),
            pl.BlockSpec((K, Cout), lambda i: (0, 0)),
            pl.BlockSpec((1, Cout), lambda i: (0, 0)),
            pl.BlockSpec((1, Cout), lambda i: (0, 0)),
        ],
        out_specs=pl.BlockSpec((tm, Cout), lambda i: (i, 0)),
        compiler_params=pltpu.CompilerParams(
            dimension_semantics=("parallel",),
            vmem_limit_bytes=_VMEM_LIMIT),
    )(xb, w.astype(jnp.bfloat16),
      scale.reshape(1, Cout).astype(jnp.float32),
      shift.reshape(1, Cout).astype(jnp.float32))
    return out if Mp == M else out[:M]


def attention_gate_fused(g2, x2, wg, wx, b, wpsi, tpsi, out_dtype=jnp.bfloat16):
    """g2: (M, Cg), x2: (M, Cl); returns x * sigmoid(psi(relu(Wg g + Wx x)))."""
    M, Cg = g2.shape
    Cl = x2.shape[1]
    Cint = wg.shape[1]
    Mp, tm = _row_tiles(M)
    gb = g2.astype(jnp.bfloat16)
    xb = x2.astype(jnp.bfloat16)
    if Mp != M:
        gb = jnp.pad(gb, ((0, Mp - M), (0, 0)))
        xb = jnp.pad(xb, ((0, Mp - M), (0, 0)))
    out = pl.pallas_call(
        _attention_kernel,
        out_shape=jax.ShapeDtypeStruct((Mp, Cl), out_dtype),
        grid=(Mp // tm,),
        in_specs=[
            pl.BlockSpec((tm, Cg), lambda i: (i, 0)),
            pl.BlockSpec((tm, Cl), lambda i: (i, 0)),
            pl.BlockSpec((Cg, Cint), lambda i: (0, 0)),
            pl.BlockSpec((Cl, Cint), lambda i: (0, 0)),
            pl.BlockSpec((1, Cint), lambda i: (0, 0)),
            pl.BlockSpec((1, Cint), lambda i: (0, 0)),
            pl.BlockSpec((1, 1), lambda i: (0, 0)),
        ],
        out_specs=pl.BlockSpec((tm, Cl), lambda i: (i, 0)),
        compiler_params=pltpu.CompilerParams(
            dimension_semantics=("parallel",),
            vmem_limit_bytes=_VMEM_LIMIT),
    )(gb, xb, wg.astype(jnp.bfloat16), wx.astype(jnp.bfloat16),
      b.astype(jnp.float32), wpsi.astype(jnp.float32), tpsi.astype(jnp.float32))
    return out if Mp == M else out[:M]


def maxpool3d(x):
    """MaxPool3d(kernel=2, stride=2) on NDHWC input."""
    N, D, H, W, C = x.shape
    xr = x.reshape(N, D // 2, 2, H // 2, 2, W // 2, 2, C)
    xr = jnp.transpose(xr, (0, 1, 3, 5, 2, 4, 6, 7)).reshape(-1, 8, C)
    M = xr.shape[0]
    Mp, tm = _row_tiles(M)
    if Mp != M:
        xr = jnp.pad(xr, ((0, Mp - M), (0, 0), (0, 0)))
    y = pl.pallas_call(
        _maxpool_kernel,
        out_shape=jax.ShapeDtypeStruct((Mp, C), x.dtype),
        grid=(Mp // tm,),
        in_specs=[pl.BlockSpec((tm, 8, C), lambda i: (i, 0, 0))],
        out_specs=pl.BlockSpec((tm, C), lambda i: (i, 0)),
        compiler_params=pltpu.CompilerParams(
            dimension_semantics=("parallel",),
            vmem_limit_bytes=_VMEM_LIMIT),
    )(xr)
    y = y if Mp == M else y[:M]
    return y.reshape(N, D // 2, H // 2, W // 2, C)


# ---------------------------------------------------------------------------
# Layer helpers
# ---------------------------------------------------------------------------
def double_conv(x, p):
    """conv3-bn-relu-conv3-bn-relu with fused residual 1x1 conv + add + relu."""
    N, D, H, W, Cin = x.shape
    Cout = p["c1_w"].shape[0]
    xp = _pad_flatten(x)

    w1 = jnp.transpose(p["c1_w"], (2, 3, 4, 1, 0)).reshape(27, Cin, Cout)
    s1, t1 = _fold_bn(p["c1_b"], p["bn1"])
    a1_flat = conv3x3_flat(xp, w1, s1, t1, H=H, W=W, relu=True)
    a1p = _pad_flatten(_unflatten(a1_flat, H, W))

    w2 = jnp.transpose(p["c2_w"], (2, 3, 4, 1, 0)).reshape(27, Cout, Cout)
    s2, t2 = _fold_bn(p["c2_b"], p["bn2"])
    rw = p["res_w"].reshape(Cout, Cin).T
    rb = p["res_b"]
    out_flat = conv3x3_flat(a1p, w2, s2, t2, H=H, W=W, relu=True,
                            res=(xp, rw, rb))
    return _unflatten(out_flat, H, W)


def conv_transpose3d_k2(x, weight, bias):
    """ConvTranspose3d kernel=2, stride=2.  weight: (Cin, Cout, 2, 2, 2)."""
    N, D, H, W, Cin = x.shape
    Cout = weight.shape[1]
    wmat = jnp.transpose(weight, (0, 2, 3, 4, 1)).reshape(Cin, 8 * Cout)
    scale = jnp.ones((8 * Cout,), jnp.float32)
    shift = jnp.tile(bias, 8)
    y = matmul_1x1(x.reshape(-1, Cin), wmat, scale, shift, relu=False)
    y = y.reshape(N, D, H, W, 2, 2, 2, Cout)
    y = jnp.transpose(y, (0, 1, 4, 2, 5, 3, 6, 7)).reshape(N, 2 * D, 2 * H, 2 * W, Cout)
    return y


def attention_block(g, x, p):
    """g: gating signal (F_g), x: skip connection (F_l); returns x * psi."""
    N, D, H, W, Cl = x.shape
    Cg = g.shape[-1]
    Cint = p["wg_w"].shape[0]

    s_g, t_g = _fold_bn(p["wg_b"], p["bn_g"])
    s_x, t_x = _fold_bn(p["wx_b"], p["bn_x"])
    wg = p["wg_w"].reshape(Cint, Cg).T * s_g[None, :]
    wx = p["wx_w"].reshape(Cint, Cl).T * s_x[None, :]
    b = (t_g + t_x).reshape(1, Cint)

    gamma, beta, mean, var = p["bn_psi"]
    sp = gamma / jnp.sqrt(var + EPS)                         # (1,)
    wpsi = (p["psi_w"].reshape(Cint) * sp[0]).reshape(1, Cint)
    tpsi = ((p["psi_b"] - mean) * sp + beta).reshape(1, 1)

    M = N * D * H * W
    out = attention_gate_fused(g.reshape(M, Cg), x.reshape(M, Cl),
                               wg, wx, b, wpsi, tpsi)
    return out.reshape(N, D, H, W, Cl)


# ---------------------------------------------------------------------------
# Full model forward
# ---------------------------------------------------------------------------
def res_unet_attention_forward(x_ncdhw, params):
    x = jnp.transpose(x_ncdhw, (0, 2, 3, 4, 1)).astype(jnp.bfloat16)   # NCDHW -> NDHWC

    d1 = double_conv(x, params["in_conv"])
    d1p = maxpool3d(d1)
    d2 = double_conv(d1p, params["down1"])
    d2p = maxpool3d(d2)
    d3 = double_conv(d2p, params["down2"])
    d3p = maxpool3d(d3)
    bott = double_conv(d3p, params["bottleneck"])

    up3 = conv_transpose3d_k2(bott, params["up3"]["w"], params["up3"]["b"])
    d3a = attention_block(up3, d3, params["att3"])
    u3 = double_conv(jnp.concatenate([up3, d3a], axis=-1), params["up_conv3"])

    up2 = conv_transpose3d_k2(u3, params["up2"]["w"], params["up2"]["b"])
    d2a = attention_block(up2, d2, params["att2"])
    u2 = double_conv(jnp.concatenate([up2, d2a], axis=-1), params["up_conv2"])

    up1 = conv_transpose3d_k2(u2, params["up1"]["w"], params["up1"]["b"])
    d1a = attention_block(up1, d1, params["att1"])
    u1 = double_conv(jnp.concatenate([up1, d1a], axis=-1), params["up_conv1"])

    N, D, H, W, C = u1.shape
    ow = params["out_conv"]["w"]
    ob = params["out_conv"]["b"]
    out_c = ow.shape[0]
    out = matmul_1x1(u1.reshape(-1, C), ow.reshape(out_c, C).T,
                     jnp.ones((out_c,), jnp.float32), ob,
                     relu=False, out_dtype=jnp.float32)
    out = out.reshape(N, D, H, W, out_c)
    return jnp.transpose(out, (0, 4, 1, 2, 3))               # NDHWC -> NCDHW


# ---------------------------------------------------------------------------
# Self-check helpers (plain JAX references)
# ---------------------------------------------------------------------------
def _conv3x3_plain(x, w, b, relu=False):
    """Standalone Conv3d(k=3, p=1) through the Pallas kernel (no BN), for testing."""
    N, D, H, W, Cin = x.shape
    Cout = w.shape[0]
    xp = _pad_flatten(x)
    w27 = jnp.transpose(w, (2, 3, 4, 1, 0)).reshape(27, Cin, Cout)
    yf = conv3x3_flat(xp, w27, jnp.ones((Cout,), jnp.float32), b,
                      H=H, W=W, relu=relu)
    return _unflatten(yf, H, W)


def _conv3d_k3_ref(x, w, b):
    """Reference Conv3d(k=3, p=1) in f32.  x: NDHWC, w: (Cout, Cin, 3, 3, 3)."""
    N, D, H, W, Cin = x.shape
    Cout = w.shape[0]
    xp = jnp.pad(x, ((0, 0), (1, 1), (1, 1), (1, 1), (0, 0)))
    out = jnp.zeros((N, D, H, W, Cout), jnp.float32)
    for kd in range(3):
        for kh in range(3):
            for kw in range(3):
                slab = xp[:, kd:kd + D, kh:kh + H, kw:kw + W, :]
                out = out + jnp.einsum("ndhwc,oc->ndhwo", slab, w[:, :, kd, kh, kw],
                                       precision=jax.lax.Precision.HIGHEST)
    return out + b


# ---------------------------------------------------------------------------
# Deterministic parameter initialization (shapes mirror the PyTorch module)
# ---------------------------------------------------------------------------
def init_params(key, in_channels, out_channels):
    keys = iter(jax.random.split(key, 256))

    def conv(cin, cout, k):
        w = 0.05 * jax.random.normal(next(keys), (cout, cin, k, k, k), jnp.float32)
        b = 0.05 * jax.random.normal(next(keys), (cout,), jnp.float32)
        return w, b

    def bn(c):
        gamma = 1.0 + 0.1 * jax.random.normal(next(keys), (c,), jnp.float32)
        beta = 0.1 * jax.random.normal(next(keys), (c,), jnp.float32)
        mean = 0.1 * jax.random.normal(next(keys), (c,), jnp.float32)
        var = 0.5 + jnp.abs(0.3 * jax.random.normal(next(keys), (c,), jnp.float32))
        return (gamma, beta, mean, var)

    def dconv(cin, cout):
        c1w, c1b = conv(cin, cout, 3)
        c2w, c2b = conv(cout, cout, 3)
        rw, rb = conv(cin, cout, 1)
        return dict(c1_w=c1w, c1_b=c1b, bn1=bn(cout),
                    c2_w=c2w, c2_b=c2b, bn2=bn(cout),
                    res_w=rw, res_b=rb)

    def att(fg, fl, fint):
        wg, bg = conv(fg, fint, 1)
        wx, bx = conv(fl, fint, 1)
        wp, bp = conv(fint, 1, 1)
        return dict(wg_w=wg, wg_b=bg, bn_g=bn(fint),
                    wx_w=wx, wx_b=bx, bn_x=bn(fint),
                    psi_w=wp, psi_b=bp, bn_psi=bn(1))

    def tconv(cin, cout):
        w = 0.05 * jax.random.normal(next(keys), (cin, cout, 2, 2, 2), jnp.float32)
        b = 0.05 * jax.random.normal(next(keys), (cout,), jnp.float32)
        return dict(w=w, b=b)

    ow, ob = conv(64, out_channels, 1)
    return dict(
        in_conv=dconv(in_channels, 64),
        down1=dconv(64, 128),
        down2=dconv(128, 256),
        bottleneck=dconv(256, 512),
        up3=tconv(512, 256), att3=att(256, 256, 128), up_conv3=dconv(512, 256),
        up2=tconv(256, 128), att2=att(128, 128, 64), up_conv2=dconv(256, 128),
        up1=tconv(128, 64), att1=att(64, 64, 32), up_conv1=dconv(128, 64),
        out_conv=dict(w=ow, b=ob),
    )


# ---------------------------------------------------------------------------
# Main
# ---------------------------------------------------------------------------
if __name__ == "__main__":
    key = jax.random.PRNGKey(0)
    k = jax.random.split(key, 16)

    # --- 1x1 matmul kernel self-check (bf16 MXU operands, f32 epilogue) ---
    a = 0.1 * jax.random.normal(k[0], (100, 70), jnp.float32)
    w = 0.1 * jax.random.normal(k[1], (70, 96), jnp.float32)
    s = 1.0 + 0.1 * jax.random.normal(k[2], (96,), jnp.float32)
    t = 0.1 * jax.random.normal(k[3], (96,), jnp.float32)
    got = matmul_1x1(a, w, s, t, relu=True, out_dtype=jnp.float32)
    ab = a.astype(jnp.bfloat16).astype(jnp.float32)
    wb = w.astype(jnp.bfloat16).astype(jnp.float32)
    ref = jnp.maximum(jnp.dot(ab, wb, precision=jax.lax.Precision.HIGHEST) * s + t, 0.0)
    np.testing.assert_allclose(np.asarray(got), np.asarray(ref), rtol=2e-2, atol=2e-2)

    # --- direct 3x3x3 conv kernel self-check (non-power-of-two spatial dims) ---
    xc = 0.1 * jax.random.normal(k[4], (1, 4, 6, 5, 16), jnp.float32)
    wc = 0.1 * jax.random.normal(k[5], (24, 16, 3, 3, 3), jnp.float32)
    bc = 0.1 * jax.random.normal(k[6], (24,), jnp.float32)
    got_c = _conv3x3_plain(xc, wc, bc, relu=False).astype(jnp.float32)
    ref_c = _conv3d_k3_ref(xc.astype(jnp.bfloat16).astype(jnp.float32),
                           wc.astype(jnp.bfloat16).astype(jnp.float32), bc)
    np.testing.assert_allclose(np.asarray(got_c), np.asarray(ref_c), rtol=3e-2, atol=3e-2)

    # --- maxpool kernel self-check ---
    xm = jax.random.normal(k[7], (1, 4, 4, 4, 32), jnp.float32).astype(jnp.bfloat16)
    got_m = maxpool3d(xm).astype(jnp.float32)
    ref_m = xm.astype(jnp.float32).reshape(1, 2, 2, 2, 2, 2, 2, 32).max(axis=(2, 4, 6))
    np.testing.assert_allclose(np.asarray(got_m), np.asarray(ref_m), rtol=1e-6, atol=1e-6)

    # --- fused attention gate self-check ---
    gg = 0.1 * jax.random.normal(k[8], (64, 16), jnp.float32)
    xx = 0.1 * jax.random.normal(k[9], (64, 16), jnp.float32)
    wga = 0.1 * jax.random.normal(k[10], (16, 8), jnp.float32)
    wxa = 0.1 * jax.random.normal(k[11], (16, 8), jnp.float32)
    ba = 0.1 * jax.random.normal(k[12], (1, 8), jnp.float32)
    wpa = 0.1 * jax.random.normal(k[13], (1, 8), jnp.float32)
    tpa = 0.1 * jax.random.normal(k[14], (1, 1), jnp.float32)
    got_a = attention_gate_fused(gg, xx, wga, wxa, ba, wpa, tpa).astype(jnp.float32)
    gb = gg.astype(jnp.bfloat16).astype(jnp.float32)
    xb = xx.astype(jnp.bfloat16).astype(jnp.float32)
    aa = jnp.maximum(gb @ wga.astype(jnp.bfloat16).astype(jnp.float32)
                     + xb @ wxa.astype(jnp.bfloat16).astype(jnp.float32) + ba, 0.0)
    psi_ref = jax.nn.sigmoid(jnp.sum(aa * wpa, axis=-1, keepdims=True) + tpa)
    ref_a = xb * psi_ref
    np.testing.assert_allclose(np.asarray(got_a), np.asarray(ref_a), rtol=2e-2, atol=2e-2)

    # --- full ResUNetAttention forward ---
    in_channels, out_channels = 2, 2
    params = init_params(jax.random.PRNGKey(0), in_channels, out_channels)
    x = jax.random.normal(jax.random.PRNGKey(0), (1, in_channels, 8, 8, 8), jnp.float32)

    fwd = jax.jit(res_unet_attention_forward)
    out = jax.block_until_ready(fwd(x, params))

    assert out.shape == (1, out_channels, 8, 8, 8), out.shape
    assert bool(jnp.all(jnp.isfinite(out)))
    print("KERNEL_OK")
</pallas_src>

<mosaic_0001>
module attributes {stable_mosaic.version = 11 : i64} {
  func.func @_matmul_kernel(%arg0: i32, %arg1: memref<100x70xbf16, #tpu.memory_space<vmem>>, %arg2: memref<70x96xbf16, #tpu.memory_space<vmem>>, %arg3: memref<1x96xf32, #tpu.memory_space<vmem>>, %arg4: memref<1x96xf32, #tpu.memory_space<vmem>>, %arg5: memref<100x96xf32, #tpu.memory_space<vmem>>) attributes {dimension_semantics = [#tpu.dimension_semantics<parallel>], iteration_bounds = array<i64: 1>, scalar_prefetch = 0 : i64, scratch_operands = 0 : i64, tpu.core_type = #tpu.core_type<tc>, window_params = [{transform_indices = @transform_0, window_bounds = array<i64: 100, 70>}, {pipeline_mode = #tpu.pipeline_mode<synchronous>, transform_indices = @transform_1, window_bounds = array<i64: 70, 96>}, {pipeline_mode = #tpu.pipeline_mode<synchronous>, transform_indices = @transform_2, window_bounds = array<i64: 1, 96>}, {pipeline_mode = #tpu.pipeline_mode<synchronous>, transform_indices = @transform_3, window_bounds = array<i64: 1, 96>}, {transform_indices = @transform_4, window_bounds = array<i64: 100, 96>}]} {
    %c0 = arith.constant 0 : index
    %c0_0 = arith.constant 0 : index
    %0 = vector.load %arg1[%c0, %c0_0] : memref<100x70xbf16, #tpu.memory_space<vmem>>, vector<100x70xbf16>
    %c0_1 = arith.constant 0 : index
    %c0_2 = arith.constant 0 : index
    %1 = vector.load %arg2[%c0_1, %c0_2] : memref<70x96xbf16, #tpu.memory_space<vmem>>, vector<70x96xbf16>
    %cst = arith.constant dense<0.000000e+00> : vector<100x96xf32>
    %2 = tpu.matmul %0, %1, %cst {dimension_numbers = #tpu.dot_dimension_numbers<[1], [0], [0], [1], [0, 0, 1, 1], [], []>} : vector<100x70xbf16>, vector<70x96xbf16>, vector<100x96xf32> -> vector<100x96xf32>
    %c0_3 = arith.constant 0 : index
    %c0_4 = arith.constant 0 : index
    %3 = vector.load %arg3[%c0_3, %c0_4] : memref<1x96xf32, #tpu.memory_space<vmem>>, vector<1x96xf32>
    %4 = vector.broadcast %3 : vector<1x96xf32> to vector<100x96xf32>
    %5 = arith.mulf %2, %4 : vector<100x96xf32>
    %c0_5 = arith.constant 0 : index
    %c0_6 = arith.constant 0 : index
    %6 = vector.load %arg4[%c0_5, %c0_6] : memref<1x96xf32, #tpu.memory_space<vmem>>, vector<1x96xf32>
    %7 = vector.broadcast %6 : vector<1x96xf32> to vector<100x96xf32>
    %8 = arith.addf %5, %7 : vector<100x96xf32>
    %cst_7 = arith.constant 0.000000e+00 : f32
    %9 = vector.broadcast %cst_7 : f32 to vector<100x96xf32>
    %10 = arith.maximumf %8, %9 : vector<100x96xf32>
    %c0_8 = arith.constant 0 : index
    %c0_9 = arith.constant 0 : index
    %11 = vector.load %arg5[%c0_8, %c0_9] : memref<100x96xf32, #tpu.memory_space<vmem>>, vector<100x96xf32>
    tpu.vector_store %arg5[%c0_8, %c0_9], %10 {strides = array<i32>} : memref<100x96xf32, #tpu.memory_space<vmem>>, vector<100x96xf32>,
    return
  }
  func.func @transform_0(%arg0: i32) -> (i32, i32) {
    %c0_i32 = arith.constant 0 : i32
    %c0_i32_0 = arith.constant 0 : i32
    return %arg0, %c0_i32 : i32, i32
  }
  func.func @transform_1(%arg0: i32) -> (i32, i32) {
    %c0_i32 = arith.constant 0 : i32
    %c0_i32_0 = arith.constant 0 : i32
    %c0_i32_1 = arith.constant 0 : i32
    return %c0_i32, %c0_i32_0 : i32, i32
  }
  func.func @transform_2(%arg0: i32) -> (i32, i32) {
    %c0_i32 = arith.constant 0 : i32
    %c0_i32_0 = arith.constant 0 : i32
    %c0_i32_1 = arith.constant 0 : i32
    return %c0_i32, %c0_i32_0 : i32, i32
  }
  func.func @transform_3(%arg0: i32) -> (i32, i32) {
    %c0_i32 = arith.constant 0 : i32
    %c0_i32_0 = arith.constant 0 : i32
    %c0_i32_1 = arith.constant 0 : i32
    return %c0_i32, %c0_i32_0 : i32, i32
  }
  func.func @transform_4(%arg0: i32) -> (i32, i32) {
    %c0_i32 = arith.constant 0 : i32
    %c0_i32_0 = arith.constant 0 : i32
    return %arg0, %c0_i32 : i32, i32
  }
}

</mosaic_0001>

<llo_original>
// kernel: tpu_custom_call.1
$region0: #{tpu_custom_call.1}
  #allocation0 [shape = 'u32[]', space=smem, size = 0x4, offset = 0x4, fixed_abs, tag = 'smem constant byte address 0x4 - core index']
  #allocation1 [shape = 'u32[144,128]{1,0:T(1,128)}', space=vmem, size = 0x12000, scoped, tag = 'internal scratch']
  %s0 = inlined_call_operand.vmem [shape: bf16[100,70], index: 0, kind: input, shape index: {}]
  %s1 = inlined_call_operand.vmem [shape: bf16[70,96], index: 1, kind: input, shape index: {}]
  %s2 = inlined_call_operand.vmem [shape: f32[1,96], index: 2, kind: input, shape index: {}]
  %s3 = inlined_call_operand.vmem [shape: f32[1,96], index: 3, kind: input, shape index: {}]
  %s4 = inlined_call_operand.vmem [shape: f32[100,96], index: 4, kind: output, shape index: {}]
  %s5 = sld [smem:[#allocation0]]
  $region26: #{tpu_custom_call.1} parent=0
    _
  %s7 = ssub.s32 1, %s5
  %s8 = scalar_select 0, %s7, %s5
  // Predicated region
  $region2: #{tpu_custom_call.1} parent=0 // pred_check
    _
  $region3: #{tpu_custom_call.1} parent=0 // pred_check_branch
    %10 = sbr.rel (0) target = $region5
  $region4: #{tpu_custom_call.1} parent=0 // pred_region
    _
  $region5: #{tpu_custom_call.1} parent=0 // pred_fallthru
    _
  // Predicated region
  $region6: #{tpu_custom_call.1} parent=0 // pred_check
    _
  $region7: #{tpu_custom_call.1} parent=0 // pred_check_branch
    %12 = sbr.rel (0) target = $region9
  $region8: #{tpu_custom_call.1} parent=0 // pred_region
    _
  $region9: #{tpu_custom_call.1} parent=0 // pred_fallthru
    _
  // Predicated region
  $region10: #{tpu_custom_call.1} parent=0 // pred_check
    _
  $region11: #{tpu_custom_call.1} parent=0 // pred_check_branch
    %14 = sbr.rel (0) target = $region13
  $region12: #{tpu_custom_call.1} parent=0 // pred_region
    _
  $region13: #{tpu_custom_call.1} parent=0 // pred_fallthru
    _
  // Predicated region
  $region14: #{tpu_custom_call.1} parent=0 // pred_check
    _
  $region15: #{tpu_custom_call.1} parent=0 // pred_check_branch
    %16 = sbr.rel (0) target = $region17
  $region16: #{tpu_custom_call.1} parent=0 // pred_region
    _
  $region17: #{tpu_custom_call.1} parent=0 // pred_fallthru
    _
  %v18 = vld [vmem:[%s0] sm:$0xf]
  %v19 = vld [vmem:[%s0 + $0x4] sm:$0xf]
  %v20 = vld [vmem:[%s0 + $0x8] sm:$0xf]
  %v21 = vld [vmem:[%s0 + $0xc] sm:$0xf]
  %v22 = vld [vmem:[%s0 + $0x10] sm:$0xf]
  %v23 = vld [vmem:[%s0 + $0x14] sm:$0xf]
  %v24 = vld [vmem:[%s0 + $0x18] sm:$0xf]
  %v25 = vld [vmem:[%s0 + $0x1c] sm:$0xf]
  %v26 = vld [vmem:[%s0 + $0x20] sm:$0xf]
  %v27 = vld [vmem:[%s0 + $0x24] sm:$0xf]
  %v28 = vld [vmem:[%s0 + $0x28] sm:$0xf]
  %v29 = vld [vmem:[%s0 + $0x2c] sm:$0xf]
  %v30 = vld [vmem:[%s0 + $0x30] sm:$0x3]
  %v31 = vld [vmem:[%s1] sm:$0xf]
  %v32 = vld [vmem:[%s1 + $0x4] sm:$0xf]
  %v33 = vld [vmem:[%s1 + $0x8] sm:$0xf]
  %v34 = vld [vmem:[%s1 + $0xc] sm:$0xf]
  %v35 = vld [vmem:[%s1 + $0x10] sm:$0xf]
  %v36 = vld [vmem:[%s1 + $0x14] sm:$0xf]
  %v37 = vld [vmem:[%s1 + $0x18] sm:$0xf]
  %v38 = vld [vmem:[%s1 + $0x1c] sm:$0xf]
  %v39 = vld [vmem:[%s1 + $0x20] sm:$0x7]
  %v53 = vunpack.c.l.b16 %v18
  %v54 = vunpack.c.l.b16 %v19
  %v55 = vunpack.c.l.b16 %v20
  %v56 = vunpack.c.l.b16 %v21
  %v57 = vunpack.c.l.b16 %v22
  %v58 = vunpack.c.l.b16 %v23
  %v59 = vunpack.c.l.b16 %v24
  %v60 = vunpack.c.l.b16 %v25
  %v61 = vunpack.c.l.b16 %v26
  %v62 = vunpack.c.l.b16 %v27
  %v63 = vunpack.c.l.b16 %v28
  %v64 = vunpack.c.l.b16 %v29
  %v65 = vunpack.c.l.b16 %v30
  %v66 = vpack.c.b16 %v54, %v53
  %v67 = vpack.c.b16 %v56, %v55
  %v68 = vpack.c.b16 %v58, %v57
  %v69 = vpack.c.b16 %v60, %v59
  %v70 = vpack.c.b16 %v62, %v61
  %v71 = vpack.c.b16 %v64, %v63
  %v72 = vpack.c.b16 %v65, %v65
  %v82 = vunpack.c.l.b16 %v31
  %v83 = vunpack.c.l.b16 %v32
  %v84 = vunpack.c.l.b16 %v33
  %v85 = vunpack.c.l.b16 %v34
  %v86 = vunpack.c.l.b16 %v35
  %v87 = vunpack.c.l.b16 %v36
  %v88 = vunpack.c.l.b16 %v37
  %v89 = vunpack.c.l.b16 %v38
  %v90 = vunpack.c.l.b16 %v39
  %v91 = vpack.c.b16 %v83, %v82
  %v92 = vpack.c.b16 %v85, %v84
  %v93 = vpack.c.b16 %v87, %v86
  %v94 = vpack.c.b16 %v89, %v88
  %v95 = vpack.c.b16 %v90, %v90
  %vm100 = vcmask 572416
  %v102 = vsel %vm100, %v66, 0
  %v105 = vsel %vm100, %v67, 0
  %v108 = vsel %vm100, %v68, 0
  %v111 = vsel %vm100, %v69, 0
  %v114 = vsel %vm100, %v70, 0
  %v117 = vsel %vm100, %v71, 0
  %v120 = vsel %vm100, %v72, 0
  %vm122 = vcmask 1042432
  %v124 = vsel %vm122, %v95, 0
  %126 = vmatprep.subr.bf16.mxu0 0
  %127 = vmatpush1.bf16.msra.mxu0 %v91
  %128 = vmatprep.subr.bf16.mxu0 0
  %129 = vmatpush1.bf16.msra.mxu0 %v92
  %130 = vmatprep.subr.bf16.mxu0 0
  %131 = vmatpush1.bf16.msra.mxu0 %v93
  %132 = vmatprep.subr.bf16.mxu0 0
  %133 = vmatpush1.bf16.msra.mxu0 %v94
  %134 = vmatprep.subr.bf16.mxu0 0
  %135 = vmatpush1.bf16.msra.mxu0 %v124
  %136 = vmatprep.subr.bf16.mxu0 0
  %137 = vmatpush1.bf16.msra.mxu0 0
  %138 = vmatprep.subr.bf16.mxu0 0
  %139 = vmatpush1.bf16.msra.mxu0 0
  %140 = vmatprep.subr.bf16.mxu0 0
  %141 = vmatpush1.bf16.msra.mxu0 0
  %142 = vmatprep.subr.bf16.mxu0 0
  %143 = vmatpush1.bf16.msra.mxu0 0
  %144 = vmatprep.subr.bf16.mxu0 0
  %145 = vmatpush1.bf16.msra.mxu0 0
  %146 = vmatprep.subr.bf16.mxu0 0
  %147 = vmatpush1.bf16.msra.mxu0 0
  %148 = vmatprep.subr.bf16.mxu0 0
  %149 = vmatpush1.bf16.msra.mxu0 0
  %150 = vmatprep.subr.bf16.mxu0 0
  %151 = vmatpush1.bf16.msra.mxu0 0
  %152 = vmatprep.subr.bf16.mxu0 0
  %153 = vmatpush1.bf16.msra.mxu0 0
  %154 = vmatprep.subr.bf16.mxu0 0
  %155 = vmatpush1.bf16.msra.mxu0 0
  %156 = vmatprep.subr.bf16.mxu0 0
  %157 = vmatpush1.bf16.msra.mxu0 0
  %158 = vmatprep.mubr.bf16.mxu0 0
  %159 = vmatmul.mubr.bf16.gmra.mrb[0].mxu0 %v102
  %v160 = vpop.f32.mrb[0].mxu0
  %v161 = vadd.f32 0.0, %v160
  %v162 = vpop.f32.mrb[0].mxu0
  %v163 = vpop.f32.mrb[0].mxu0
  %v164 = vadd.f32 0.0, %v163
  %v165 = vpop.f32.mrb[0].mxu0
  %166 = vmatprep.mubr.bf16.mxu0 0
  %167 = vmatmul.mubr.bf16.gmra.mrb[0].mxu0 %v105
  %v168 = vpop.f32.mrb[0].mxu0
  %v169 = vadd.f32 0.0, %v168
  %v170 = vpop.f32.mrb[0].mxu0
  %v171 = vpop.f32.mrb[0].mxu0
  %v172 = vadd.f32 0.0, %v171
  %v173 = vpop.f32.mrb[0].mxu0
  %174 = vmatprep.mubr.bf16.mxu0 0
  %175 = vmatmul.mubr.bf16.gmra.mrb[0].mxu0 %v108
  %v176 = vpop.f32.mrb[0].mxu0
  %v177 = vadd.f32 0.0, %v176
  %v178 = vpop.f32.mrb[0].mxu0
  %v179 = vpop.f32.mrb[0].mxu0
  %v180 = vadd.f32 0.0, %v179
  %v181 = vpop.f32.mrb[0].mxu0
  %182 = vmatprep.mubr.bf16.mxu0 0
  %183 = vmatmul.mubr.bf16.gmra.mrb[0].mxu0 %v111
  %v184 = vpop.f32.mrb[0].mxu0
  %v185 = vadd.f32 0.0, %v184
  %v186 = vpop.f32.mrb[0].mxu0
  %v187 = vpop.f32.mrb[0].mxu0
  %v188 = vadd.f32 0.0, %v187
  %v189 = vpop.f32.mrb[0].mxu0
  %190 = vmatprep.mubr.bf16.mxu0 0
  %191 = vmatmul.mubr.bf16.gmra.mrb[0].mxu0 %v114
  %v192 = vpop.f32.mrb[0].mxu0
  %v193 = vadd.f32 0.0, %v192
  %v194 = vpop.f32.mrb[0].mxu0
  %v195 = vpop.f32.mrb[0].mxu0
  %v196 = vadd.f32 0.0, %v195
  %v197 = vpop.f32.mrb[0].mxu0
  %198 = vmatprep.mubr.bf16.mxu0 0
  %199 = vmatmul.mubr.bf16.gmra.mrb[0].mxu0 %v117
  %v200 = vpop.f32.mrb[0].mxu0
  %v201 = vadd.f32 0.0, %v200
  %v202 = vpop.f32.mrb[0].mxu0
  %v203 = vpop.f32.mrb[0].mxu0
  %v204 = vadd.f32 0.0, %v203
  %v205 = vpop.f32.mrb[0].mxu0
  %206 = vmatprep.mubr.bf16.mxu0 0
  %207 = vmatmul.mubr.bf16.gmra.mrb[0].mxu0 %v120
  %v208 = vpop.f32.mrb[0].mxu0
  %v209 = vadd.f32 0.0, %v208
  %v210 = vpop.f32.mrb[0].mxu0
  %v211 = vpop.f32.mrb[0].mxu0
  %v212 = vpop.f32.mrb[0].mxu0
  %213 = vdwg.mxu0
  %v214 = vld [vmem:[%s2] sm:$0x1]
  %v216 = vlaneseq
  %v217 = vshrl.u32 %v216, 7
  %v218 = vsub.s32 0, %v217
  %v219 = vrot.slane %v214, %v218
  %v221 = vmul.f32 %v161, %v219
  %v222 = vmul.f32 %v164, %v219
  %v223 = vmul.f32 %v169, %v219
  %v224 = vmul.f32 %v172, %v219
  %v225 = vmul.f32 %v177, %v219
  %v226 = vmul.f32 %v180, %v219
  %v227 = vmul.f32 %v185, %v219
  %v228 = vmul.f32 %v188, %v219
  %v229 = vmul.f32 %v193, %v219
  %v230 = vmul.f32 %v196, %v219
  %v231 = vmul.f32 %v201, %v219
  %v232 = vmul.f32 %v204, %v219
  %v233 = vmul.f32 %v209, %v219
  %v234 = vld [vmem:[%s3] sm:$0x1]
  %v236 = vlaneseq
  %v237 = vshrl.u32 %v236, 7
  %v238 = vsub.s32 0, %v237
  %v239 = vrot.slane %v234, %v238
  %v241 = vadd.f32 %v221, %v239
  %v242 = vadd.f32 %v222, %v239
  %v243 = vadd.f32 %v223, %v239
  %v244 = vadd.f32 %v224, %v239
  %v245 = vadd.f32 %v225, %v239
  %v246 = vadd.f32 %v226, %v239
  %v247 = vadd.f32 %v227, %v239
  %v248 = vadd.f32 %v228, %v239
  %v249 = vadd.f32 %v229, %v239
  %v250 = vadd.f32 %v230, %v239
  %v251 = vadd.f32 %v231, %v239
  %v252 = vadd.f32 %v232, %v239
  %v253 = vadd.f32 %v233, %v239
  %v254 = vmax.f32 %v241, 0.0
  %v255 = vmax.f32 %v242, 0.0
  %v256 = vmax.f32 %v243, 0.0
  %v257 = vmax.f32 %v244, 0.0
  %v258 = vmax.f32 %v245, 0.0
  %v259 = vmax.f32 %v246, 0.0
  %v260 = vmax.f32 %v247, 0.0
  %v261 = vmax.f32 %v248, 0.0
  %v262 = vmax.f32 %v249, 0.0
  %v263 = vmax.f32 %v250, 0.0
  %v264 = vmax.f32 %v251, 0.0
  %v265 = vmax.f32 %v252, 0.0
  %v266 = vmax.f32 %v253, 0.0
  %vm267 = vcmask 785408
  %268 = vst.msk [vmem:[%s4] sm:$0xff] %vm267, %v254
  %269 = vst.msk [vmem:[%s4 + $0x8] sm:$0xff] %vm267, %v255
  %270 = vst.msk [vmem:[%s4 + $0x10] sm:$0xff] %vm267, %v256
  %271 = vst.msk [vmem:[%s4 + $0x18] sm:$0xff] %vm267, %v257
  %272 = vst.msk [vmem:[%s4 + $0x20] sm:$0xff] %vm267, %v258
  %273 = vst.msk [vmem:[%s4 + $0x28] sm:$0xff] %vm267, %v259
  %274 = vst.msk [vmem:[%s4 + $0x30] sm:$0xff] %vm267, %v260
  %275 = vst.msk [vmem:[%s4 + $0x38] sm:$0xff] %vm267, %v261
  %276 = vst.msk [vmem:[%s4 + $0x40] sm:$0xff] %vm267, %v262
  %277 = vst.msk [vmem:[%s4 + $0x48] sm:$0xff] %vm267, %v263
  %278 = vst.msk [vmem:[%s4 + $0x50] sm:$0xff] %vm267, %v264
  %279 = vst.msk [vmem:[%s4 + $0x58] sm:$0xff] %vm267, %v265
  %vm280 = vcmask 781312
  %281 = vst.msk [vmem:[%s4 + $0x60] sm:$0xf] %vm280, %v266
  // Predicated region
  $region18: #{tpu_custom_call.1} parent=0 // pred_check
    _
  $region19: #{tpu_custom_call.1} parent=0 // pred_check_branch
    %283 = sbr.rel (0) target = $region21
  $region20: #{tpu_custom_call.1} parent=0 // pred_region
    _
  $region21: #{tpu_custom_call.1} parent=0 // pred_fallthru
    _
  // Predicated region
  $region22: #{tpu_custom_call.1} parent=0 // pred_check
    _
  $region23: #{tpu_custom_call.1} parent=0 // pred_check_branch
    %285 = sbr.rel (0) target = $region25
  $region24: #{tpu_custom_call.1} parent=0 // pred_region
    _
  $region25: #{tpu_custom_call.1} parent=0 // pred_fallthru
    _

</llo_original>
